<compile_context>
chip_gen: v7x
topology: tpu7x:2x2x1
jax: 0.10.0
libtpu: 0.0.40
codegen_flags: <defaults>
</compile_context>

<pallas_src>
import math

import jax
import jax.numpy as jnp
from jax.experimental import pallas as pl
from jax.experimental.pallas import tpu as pltpu

_LANES = 128


def _round_up(x: int, m: int) -> int:
    return (x + m - 1) // m * m


def _make_prior(lambda_p: float, max_steps: int = 12, prior_type: str = "geometric"):
    """Deterministic construction of the (non-trainable) prior, mirroring __init__."""
    if prior_type == "geometric":
        vals = []
        not_halted = 1.0
        for _ in range(max_steps):
            vals.append(not_halted * lambda_p)
            not_halted *= (1.0 - lambda_p)
        vals[-1] = 1.0 - sum(vals[:-1])
        p_g = jnp.asarray(vals, dtype=jnp.float32)
    elif prior_type == "normal":
        mu = 1.0 / lambda_p
        domain = jnp.arange(1, max_steps + 1, dtype=jnp.float32)
        density = jnp.exp(-((domain - mu) ** 2))
        p_g = density / density.sum()
    else:
        raise ValueError(prior_type)
    total = float(jnp.sum(p_g))
    assert 0.99 < total < 1.01
    return p_g


def _periodic_weight_tile(pg, rows, T):
    """W[r, l] = pg[(r*128 + l) % T]  (valid for any row offset that is 0 mod period)."""
    idx = (jnp.arange(rows * _LANES, dtype=jnp.int32) % T).reshape(rows, _LANES)
    return pg[idx]


def regularization_loss(p, p_g, *, block_bytes_target=4 * 1024 * 1024,
                        chunk_rows_target=512):
    """p: (B, T) halting probabilities; p_g: (max_steps,) prior. Returns scalar f32 loss."""
    B, T = p.shape
    assert p_g.shape[0] >= T
    N = B * T
    itemsize = jnp.dtype(p.dtype).itemsize

    # ---- trace-time constant: prior entropy term sum_t p_g*log(p_g) (pg==0 -> 0) ----
    pg = p_g[:T].astype(jnp.float32)
    prior_term = jnp.sum(jnp.where(pg > 0, pg * jnp.log(jnp.where(pg > 0, pg, 1.0)), 0.0))

    # ---- periodic-weight / sublane alignment ----
    period_rows = math.lcm(T, _LANES) // _LANES          # weight pattern period (rows)
    sublane = 8 * max(1, 4 // itemsize)                  # 8 (f32) / 16 (bf16) rows
    row_align = math.lcm(period_rows, sublane)

    # ---- free lane-dense flat view; copy only when the lane tail forces it ----
    flat = p.reshape(-1)
    if N % _LANES != 0:
        padded_n = _round_up(N, row_align * _LANES)
    elif N < row_align * _LANES:
        padded_n = row_align * _LANES
    else:
        padded_n = N
    if padded_n != N:
        flat = jnp.concatenate([flat, jnp.ones((padded_n - N,), p.dtype)])  # log(1) = 0
    R = padded_n // _LANES
    x2d = flat.reshape(R, _LANES)

    # ---- chunk (bounds in-kernel f32 temps) and block (DMA tile) sizing ----
    r_floor = (R // row_align) * row_align
    chunk_rows = max(row_align, (chunk_rows_target // row_align) * row_align)
    chunk_rows = min(chunk_rows, r_floor)
    block_rows_target = max(
        chunk_rows,
        (block_bytes_target // (_LANES * itemsize) // chunk_rows) * chunk_rows)
    block_rows = min(block_rows_target, (r_floor // chunk_rows) * chunk_rows)
    n_chunks = block_rows // chunk_rows

    n_blocks = R // block_rows                           # full blocks only
    # Megacore: even block counts split across an outer 'parallel' axis (2 TCs on v7x),
    # each outer index producing its own partial.  Harmless on single-TC v5e/v6e.
    n_outer = 2 if (n_blocks >= 2 and n_blocks % 2 == 0) else 1
    n_inner = n_blocks // n_outer
    covered_rows = n_outer * n_inner * block_rows

    w_tile = _periodic_weight_tile(pg, chunk_rows, T)    # (chunk_rows, 128) f32, resident

    def kernel(x_ref, w_ref, out_ref, acc_ref):
        i = pl.program_id(1)

        @pl.when(i == 0)
        def _init():
            acc_ref[...] = jnp.zeros_like(acc_ref)

        def accumulate(x):
            # log on the EUP, cast+add on the VPU; acc is a VMEM f32 tile.
            acc_ref[...] += jnp.log(x.astype(jnp.float32))

        if n_chunks == 1:
            accumulate(x_ref[...])
        else:
            @pl.loop(0, n_chunks)
            def _chunk(c):
                start = pl.multiple_of(c * chunk_rows, 8)
                accumulate(x_ref[pl.ds(start, chunk_rows), :])

        @pl.when(i == n_inner - 1)
        def _finalize():
            partial = jnp.sum(w_ref[...] * acc_ref[...])       # one XLU reduce per outer
            out_ref[...] = jnp.full((8, _LANES), partial, dtype=jnp.float32)

    block_bytes = block_rows * _LANES * itemsize
    chunk_bytes_f32 = chunk_rows * _LANES * 4
    vmem_need = 2 * block_bytes + 7 * chunk_bytes_f32 + 2 * 8 * _LANES * 4
    vmem_limit = max(16 * 1024 * 1024, int(vmem_need * 1.4))

    partials = pl.pallas_call(
        kernel,
        out_shape=jax.ShapeDtypeStruct((n_outer * 8, _LANES), jnp.float32),
        grid=(n_outer, n_inner),
        in_specs=[
            pl.BlockSpec((block_rows, _LANES), lambda o, i: (o * n_inner + i, 0)),
            pl.BlockSpec((chunk_rows, _LANES), lambda o, i: (0, 0)),   # weight, resident
        ],
        out_specs=pl.BlockSpec((8, _LANES), lambda o, i: (o, 0)),
        scratch_shapes=[pltpu.VMEM((chunk_rows, _LANES), jnp.float32)],
        compiler_params=pltpu.CompilerParams(
            dimension_semantics=("parallel", "arbitrary"),
            vmem_limit_bytes=vmem_limit),
        cost_estimate=pl.CostEstimate(
            flops=2 * covered_rows * _LANES,
            transcendentals=covered_rows * _LANES,
            bytes_accessed=covered_rows * _LANES * itemsize + chunk_bytes_f32
                           + n_outer * 8 * _LANES * 4),
    )(x2d, w_tile)

    cross = jnp.sum(partials[0::8, 0])

    # Rows not covered by full blocks (< one block): tiny, left to XLA so it fuses.
    rem_rows = R - covered_rows
    if rem_rows:
        w_rem = _periodic_weight_tile(pg, rem_rows, T)
        rem = x2d[covered_rows:, :].astype(jnp.float32)
        cross = cross + jnp.sum(w_rem * jnp.log(rem))

    return prior_term - cross / B


def _reference(p, p_g):
    B, T = p.shape
    pg = p_g[:T].astype(jnp.float32)[None, :]
    return jnp.sum(pg * (jnp.log(pg) - jnp.log(p.astype(jnp.float32)))) / B


if __name__ == "__main__":
    lambda_p = 0.2
    max_steps = 12
    p_g = _make_prior(lambda_p, max_steps, "geometric")

    k1, k2, k3 = jax.random.split(jax.random.PRNGKey(0), 3)

    # Case 1: module-typical tiny shapes (batch=2, ponder steps=8) -> single padded block.
    p1 = jax.nn.softmax(jax.random.normal(k1, (2, 8), jnp.float32), axis=-1)
    loss1 = jax.block_until_ready(regularization_loss(p1, p_g))
    ref1 = _reference(p1, p_g)
    assert jnp.allclose(loss1, ref1, rtol=1e-4, atol=1e-6), (loss1, ref1)
    assert bool(jnp.isfinite(loss1))

    # Case 2: zero-copy lane-aligned input, 4 full blocks on a (parallel, arbitrary) grid
    # (per-core partials) plus a small wrapper-side remainder.
    p2 = jax.nn.softmax(jax.random.normal(k2, (1056, 12), jnp.float32), axis=-1)
    loss2 = jax.block_until_ready(
        regularization_loss(p2, p_g, block_bytes_target=24 * 128 * 4, chunk_rows_target=24))
    ref2 = _reference(p2, p_g)
    assert jnp.allclose(loss2, ref2, rtol=1e-4, atol=1e-6), (loss2, ref2)

    # Case 2b: bf16 passthrough (halved HBM bytes; kernel upcasts to f32 in VMEM).
    loss2b = jax.block_until_ready(
        regularization_loss(p2.astype(jnp.bfloat16), p_g,
                            block_bytes_target=24 * 128 * 4, chunk_rows_target=24))
    assert jnp.allclose(loss2b, ref2, rtol=3e-2, atol=1e-3), (loss2b, ref2)

    # Case 3: single block processed with a 4-deep in-kernel chunk loop (bounded f32 temps).
    p3 = jax.nn.softmax(jax.random.normal(k3, (2048, 12), jnp.float32), axis=-1)
    loss3 = jax.block_until_ready(
        regularization_loss(p3, p_g, block_bytes_target=192 * 128 * 4, chunk_rows_target=48))
    ref3 = _reference(p3, p_g)
    assert jnp.allclose(loss3, ref3, rtol=1e-4, atol=1e-6), (loss3, ref3)

    print("KERNEL_OK")
</pallas_src>

<mosaic_0001>
module attributes {stable_mosaic.version = 11 : i64} {
  func.func @kernel(%arg0: i32, %arg1: i32, %arg2: memref<8x128xf32, #tpu.memory_space<vmem>>, %arg3: memref<8x128xf32, #tpu.memory_space<vmem>>, %arg4: memref<8x128xf32, #tpu.memory_space<vmem>>, %arg5: memref<8x128xf32, #tpu.memory_space<vmem>>) attributes {dimension_semantics = [#tpu.dimension_semantics<parallel>, #tpu.dimension_semantics<arbitrary>], iteration_bounds = array<i64: 1, 1>, scalar_prefetch = 0 : i64, scratch_operands = 1 : i64, tpu.core_type = #tpu.core_type<tc>, window_params = [{transform_indices = @transform_0, window_bounds = array<i64: 8, 128>}, {pipeline_mode = #tpu.pipeline_mode<synchronous>, transform_indices = @transform_1, window_bounds = array<i64: 8, 128>}, {transform_indices = @transform_2, window_bounds = array<i64: 8, 128>}]} {
    %c0_i32 = arith.constant 0 : i32
    %0 = arith.cmpi eq, %arg1, %c0_i32 : i32
    %1 = arith.extui %0 : i1 to i32
    %c0_i32_0 = arith.constant 0 : i32
    %2 = arith.cmpi ne, %1, %c0_i32_0 : i32
    scf.if %2 {
      %cst = arith.constant 0.000000e+00 : f32
      %11 = vector.broadcast %cst : f32 to vector<8x128xf32>
      %c0_8 = arith.constant 0 : index
      %c0_9 = arith.constant 0 : index
      %12 = vector.load %arg5[%c0_8, %c0_9] : memref<8x128xf32, #tpu.memory_space<vmem>>, vector<8x128xf32>
      tpu.vector_store %arg5[%c0_8, %c0_9], %11 {strides = array<i32>} : memref<8x128xf32, #tpu.memory_space<vmem>>, vector<8x128xf32>,
    } else {
    }
    %c0 = arith.constant 0 : index
    %c0_1 = arith.constant 0 : index
    %3 = vector.load %arg2[%c0, %c0_1] : memref<8x128xf32, #tpu.memory_space<vmem>>, vector<8x128xf32>
    %c0_2 = arith.constant 0 : index
    %c0_3 = arith.constant 0 : index
    %4 = vector.load %arg5[%c0_2, %c0_3] : memref<8x128xf32, #tpu.memory_space<vmem>>, vector<8x128xf32>
    %5 = math.log %3 : vector<8x128xf32>
    %6 = arith.addf %4, %5 : vector<8x128xf32>
    %c0_4 = arith.constant 0 : index
    %c0_5 = arith.constant 0 : index
    %7 = vector.load %arg5[%c0_4, %c0_5] : memref<8x128xf32, #tpu.memory_space<vmem>>, vector<8x128xf32>
    tpu.vector_store %arg5[%c0_4, %c0_5], %6 {strides = array<i32>} : memref<8x128xf32, #tpu.memory_space<vmem>>, vector<8x128xf32>,
    %c0_i32_6 = arith.constant 0 : i32
    %8 = arith.cmpi eq, %arg1, %c0_i32_6 : i32
    %9 = arith.extui %8 : i1 to i32
    %c0_i32_7 = arith.constant 0 : i32
    %10 = arith.cmpi ne, %9, %c0_i32_7 : i32
    scf.if %10 {
      %c0_8 = arith.constant 0 : index
      %c0_9 = arith.constant 0 : index
      %11 = vector.load %arg3[%c0_8, %c0_9] : memref<8x128xf32, #tpu.memory_space<vmem>>, vector<8x128xf32>
      %c0_10 = arith.constant 0 : index
      %c0_11 = arith.constant 0 : index
      %12 = vector.load %arg5[%c0_10, %c0_11] : memref<8x128xf32, #tpu.memory_space<vmem>>, vector<8x128xf32>
      %13 = arith.mulf %11, %12 : vector<8x128xf32>
      %14 = vector.shape_cast %13 : vector<8x128xf32> to vector<1x8x128xf32>
      %cst = arith.constant dense<0.000000e+00> : vector<1xf32>
      %15 = vector.multi_reduction <add>, %14, %cst [1, 2] : vector<1x8x128xf32> to vector<1xf32>
      %16 = vector.shape_cast %15 : vector<1xf32> to vector<1x1x1xf32>
      %17 = vector.extract %16[0, 0, 0] : f32 from vector<1x1x1xf32>
      %18 = vector.broadcast %17 : f32 to vector<8x128xf32>
      %c0_12 = arith.constant 0 : index
      %c0_13 = arith.constant 0 : index
      %19 = vector.load %arg4[%c0_12, %c0_13] : memref<8x128xf32, #tpu.memory_space<vmem>>, vector<8x128xf32>
      tpu.vector_store %arg4[%c0_12, %c0_13], %18 {strides = array<i32>} : memref<8x128xf32, #tpu.memory_space<vmem>>, vector<8x128xf32>,
    } else {
    }
    return
  }
  func.func @transform_0(%arg0: i32, %arg1: i32) -> (i32, i32) {
    %c1_i32 = arith.constant 1 : i32
    %0 = arith.muli %arg0, %c1_i32 : i32
    %1 = arith.addi %0, %arg1 : i32
    %c0_i32 = arith.constant 0 : i32
    %c0_i32_0 = arith.constant 0 : i32
    return %1, %c0_i32 : i32, i32
  }
  func.func @transform_1(%arg0: i32, %arg1: i32) -> (i32, i32) {
    %c0_i32 = arith.constant 0 : i32
    %c0_i32_0 = arith.constant 0 : i32
    %c0_i32_1 = arith.constant 0 : i32
    return %c0_i32, %c0_i32_0 : i32, i32
  }
  func.func @transform_2(%arg0: i32, %arg1: i32) -> (i32, i32) {
    %c0_i32 = arith.constant 0 : i32
    %c0_i32_0 = arith.constant 0 : i32
    return %arg0, %c0_i32 : i32, i32
  }
}

</mosaic_0001>

<llo_original>
// kernel: tpu_custom_call.1
$region0: #{tpu_custom_call.1}
  #allocation0 [shape = 'u32[]', space=smem, size = 0x4, offset = 0x4, fixed_abs, tag = 'smem constant byte address 0x4 - core index']
  #allocation1 [shape = 'u32[144,128]{1,0:T(1,128)}', space=vmem, size = 0x12000, scoped, tag = 'internal scratch']
  #allocation2 [shape = 'f32[8,128]{1,0:T(8,128)}', space=vmem, size = 0x1000, scoped, tag = 'scratch operand']
  %s0 = inlined_call_operand.hbm [shape: f32[8,128], index: 0, kind: input, shape index: {}]
  %s1 = inlined_call_operand.hbm [shape: f32[8,128], index: 1, kind: input, shape index: {}]
  %s2 = inlined_call_operand.hbm [shape: f32[8,128], index: 2, kind: output, shape index: {}]
  %s3 = sld [smem:[#allocation0]]
  $region34: #{tpu_custom_call.1} parent=0
    _
  %s5 = ssub.s32 1, %s3
  %s6 = scalar_select 0, %s5, %s3
  $region1: #{tpu_custom_call.1} parent=0
    #allocation3 [shape = 'u8[4096]{0}', space=vmem, size = 0x1000, scoped, tag = 'input window, operand 0, single buffered']
    #allocation4 [shape = 's32[1]{0}', space=sflag, size = 0x4, scoped, tag = 'scoped memory for tpu_custom_call.1']
    #allocation5 [shape = 's32[1]{0}', space=sflag, size = 0x4, scoped, tag = 'scoped memory for tpu_custom_call.1']
    #allocation6 [shape = 'u8[4096]{0}', space=vmem, size = 0x1000, scoped, tag = 'input window, operand 1, single buffered']
    #allocation7 [shape = 's32[1]{0}', space=sflag, size = 0x4, scoped, tag = 'scoped memory for tpu_custom_call.1']
    #allocation8 [shape = 'u8[4096]{0}', space=vmem, size = 0x1000, scoped, tag = 'output window, operand 0, single buffered']
    %7 = vsyncpa [#allocation4], 0
    %8 = vsyncpa [#allocation7], 0
    %9 = vsyncpa [#allocation5], 0
    // Predicated region
    $region2: #{tpu_custom_call.1} parent=1 // pred_check
      _
    $region3: #{tpu_custom_call.1} parent=1 // pred_check_branch
      %11 = sbr.rel (0) target = $region5
    $region4: #{tpu_custom_call.1} parent=1 // pred_region
      %s12 = sadd.s32 0, 0
      %s14 = ssub.s32 128, 128
      %15 = vsyncadd [#allocation4], %s14
      %s16 = smul.addr %s12, 128
      %s17 = scalar_lea.hbm %s0, %s16
      %s19 = sshll.u32 [#allocation3], 4
      %s20 = int_to_ptr.vmem [resolvable:$true] %s19
      %22 = dma.hbm_to_vmem [thread:$0]  %s17, 128, %s20, [#allocation4]
    $region5: #{tpu_custom_call.1} parent=1 // pred_fallthru
      _
    // Predicated region
    $region6: #{tpu_custom_call.1} parent=1 // pred_check
      _
    $region7: #{tpu_custom_call.1} parent=1 // pred_check_branch
      %24 = sbr.rel (0) target = $region9
    $region8: #{tpu_custom_call.1} parent=1 // pred_region
      %s26 = ssub.s32 128, 128
      %27 = vsyncadd [#allocation7], %s26
      %s29 = sshll.u32 [#allocation6], 4
      %s30 = int_to_ptr.vmem [resolvable:$true] %s29
      %32 = dma.hbm_to_vmem [thread:$0]  %s1, 128, %s30, [#allocation7]
    $region9: #{tpu_custom_call.1} parent=1 // pred_fallthru
      _
    // Predicated region
    $region10: #{tpu_custom_call.1} parent=1 // pred_check
      _
    $region11: #{tpu_custom_call.1} parent=1 // pred_check_branch
      %34 = sbr.rel (0) target = $region13
    $region12: #{tpu_custom_call.1} parent=1 // pred_region
      %35 = dma.done [#allocation4], 128
    $region13: #{tpu_custom_call.1} parent=1 // pred_fallthru
      _
    // Predicated region
    $region14: #{tpu_custom_call.1} parent=1 // pred_check
      _
    $region15: #{tpu_custom_call.1} parent=1 // pred_check_branch
      %37 = sbr.rel (0) target = $region17
    $region16: #{tpu_custom_call.1} parent=1 // pred_region
      %38 = dma.done [#allocation7], 128
    $region17: #{tpu_custom_call.1} parent=1 // pred_fallthru
      _
    %s39 = sadd.s32 0, 0
    %p40 = scmp.eq.s32.totalorder 0, 0
    // Predicated region
    $region18: #{tpu_custom_call.1} parent=1 // pred_check
      %p41 = pneg %p40
    $region19: #{tpu_custom_call.1} parent=1 // pred_check_branch
      %43 = sbr.rel (%p41) target = $region21
    $region20: #{tpu_custom_call.1} parent=1 // pred_region
      %44 = vst [vmem:[#allocation2] sm:$0xff] 0.0
    $region21: #{tpu_custom_call.1} parent=1 // pred_fallthru
      _
    %v45 = vld [vmem:[#allocation3] sm:$0xff]
    %v46 = vld [vmem:[#allocation2] sm:$0xff]
    %v47 = vlog2.pop %v45
    %v48 = vmul.f32 %v47, 0.6931472
    %v49 = vadd.f32 %v46, %v48
    %50 = vst [vmem:[#allocation2] sm:$0xff] %v49
    // Predicated region
    $region22: #{tpu_custom_call.1} parent=1 // pred_check
      %p51 = pneg %p40
    $region23: #{tpu_custom_call.1} parent=1 // pred_check_branch
      %53 = sbr.rel (%p51) target = $region25
    $region24: #{tpu_custom_call.1} parent=1 // pred_region
      %v54 = vld [vmem:[#allocation6] sm:$0xff]
      %v55 = vld [vmem:[#allocation2] sm:$0xff]
      %v56 = vmul.f32 %v54, %v55
      %57 = vadd.xlane.f32.xlu0 %v56
      %v58 = vpop.xlane.xlu0 %57
      %v59 = vrot.slane %v58, 4
      %v60 = vadd.f32 %v58, %v59
      %v61 = vrot.slane %v60, 2
      %v62 = vadd.f32 %v60, %v61
      %v63 = vrot.slane %v62, 1
      %v64 = vadd.f32 %v62, %v63
      %s65 = vtos %v64
      %v66 = vstv %s65
      %67 = vst [vmem:[#allocation8] sm:$0xff] %v66
    $region25: #{tpu_custom_call.1} parent=1 // pred_fallthru
      _
    // Predicated region
    $region26: #{tpu_custom_call.1} parent=1 // pred_check
      _
    $region27: #{tpu_custom_call.1} parent=1 // pred_check_branch
      %69 = sbr.rel (0) target = $region29
    $region28: #{tpu_custom_call.1} parent=1 // pred_region
      %s71 = ssub.s32 128, 128
      %72 = vsyncadd [#allocation5], %s71
      %s74 = sshll.u32 [#allocation8], 4
      %s75 = int_to_ptr.vmem [resolvable:$true] %s74
      %77 = dma.vmem_to_hbm [thread:$0]  %s75, 128, %s2, [#allocation5]
    $region29: #{tpu_custom_call.1} parent=1 // pred_fallthru
      _
    // Predicated region
    $region30: #{tpu_custom_call.1} parent=1 // pred_check
      _
    $region31: #{tpu_custom_call.1} parent=1 // pred_check_branch
      %79 = sbr.rel (0) target = $region33
    $region32: #{tpu_custom_call.1} parent=1 // pred_region
      %80 = dma.done [#allocation5], 128
    $region33: #{tpu_custom_call.1} parent=1 // pred_fallthru
      _
    %81 = vsyncpa [#allocation4], 1
    %82 = vsyncpa [#allocation7], 1
    %83 = vsyncpa [#allocation5], 1

</llo_original>
